<compile_context>
chip_gen: v6e
topology: v6e:2x2x1
jax: 0.10.0
libtpu: 0.0.40
codegen_flags: <defaults>
</compile_context>

<pallas_src>
import functools

import jax
import jax.numpy as jnp
from jax import lax
from jax.experimental import pallas as pl
from jax.experimental.pallas import tpu as pltpu


# ----------------------------------------------------------------------------
# Stage 1: per-head QKV projection (x @ W), bf16 operands, f32 accumulation.
# ----------------------------------------------------------------------------
def _qkv_proj_kernel(x_ref, wq_ref, wkv_ref, q12_ref, kv_ref):
    xb = x_ref[0]                                   # (blk_n, C) bf16
    for c in range(2):                              # q1, q2
        q12_ref[c, 0, 0] = jnp.dot(
            xb, wq_ref[c, 0], preferred_element_type=jnp.float32
        ).astype(q12_ref.dtype)
    for c in range(3):                              # k1, k2, v
        kv_ref[c, 0, 0] = jnp.dot(
            xb, wkv_ref[c, 0], preferred_element_type=jnp.float32
        ).astype(kv_ref.dtype)


# ----------------------------------------------------------------------------
# Stage 2: flash-style differential attention (two online softmaxes).
# ----------------------------------------------------------------------------
def _flash_diff_kernel(q12_ref, kv_ref, lam_ref, o_ref,
                       m1, l1, m2, l2, acc1, acc2, *, scale):
    ki = pl.program_id(3)

    @pl.when(ki == 0)
    def _init():
        m1[...] = jnp.full_like(m1, -jnp.inf)
        m2[...] = jnp.full_like(m2, -jnp.inf)
        l1[...] = jnp.zeros_like(l1)
        l2[...] = jnp.zeros_like(l2)
        acc1[...] = jnp.zeros_like(acc1)
        acc2[...] = jnp.zeros_like(acc2)

    q1 = q12_ref[0, 0, 0]                           # (blk_q, D) bf16
    q2 = q12_ref[1, 0, 0]
    k1 = kv_ref[0, 0, 0]                            # (blk_k, D) bf16
    k2 = kv_ref[1, 0, 0]
    v = kv_ref[2, 0, 0]

    # Contract the last dim of both operands: no K transpose (no XLU traffic).
    dn = (((1,), (1,)), ((), ()))
    s1 = lax.dot_general(q1, k1, dn, preferred_element_type=jnp.float32) * scale
    s2 = lax.dot_general(q2, k2, dn, preferred_element_type=jnp.float32) * scale

    def _online_update(s, m, l, acc):
        m_new = jnp.maximum(m[...], jnp.max(s, axis=-1, keepdims=True))
        alpha = jnp.exp(m[...] - m_new)
        p = jnp.exp(s - m_new)
        l[...] = alpha * l[...] + jnp.sum(p, axis=-1, keepdims=True)
        acc[...] = alpha * acc[...] + jnp.dot(
            p.astype(v.dtype), v, preferred_element_type=jnp.float32)
        m[...] = m_new

    _online_update(s1, m1, l1, acc1)
    _online_update(s2, m2, l2, acc2)

    @pl.when(ki == pl.num_programs(3) - 1)
    def _finalize():
        lam = lam_ref[0, 0]
        o1 = acc1[...] * pl.reciprocal(l1[...], approx=True)
        o2 = acc2[...] * pl.reciprocal(l2[...], approx=True)
        o_ref[0, 0] = (o1 - lam * o2).astype(o_ref.dtype)


# ----------------------------------------------------------------------------
# Stage 3: RMSNorm + (1 - lambda_init) scale + output projection.
# TODO(synk): the PyTorch module builds RMSNorm(2*head_dim) but applies it to a
# (B, N, C) tensor; this only type-checks when num_heads == 2 (2*head_dim == C).
# We normalize over C, which matches the module exactly in that configuration.
# ----------------------------------------------------------------------------
def _norm_proj_kernel(y_ref, wp_ref, bp_ref, o_ref, *, lambda_init, eps):
    y = y_ref[0]                                    # (H, blk_n, D) f32
    H, n, D = y.shape
    C = H * D
    ss = jnp.sum(y * y, axis=2, keepdims=True)      # (H, blk_n, 1)
    ss = jnp.sum(ss, axis=0, keepdims=True)         # (1, blk_n, 1)
    inv = lax.rsqrt(ss / C + eps)                   # RMSNorm over all C channels
    y_n = (y * inv * (1.0 - lambda_init)).astype(jnp.bfloat16)

    acc = jnp.zeros((n, C), jnp.float32)
    for h in range(H):                              # per-head contraction: no concat
        acc = acc + jnp.dot(y_n[h], wp_ref[h],
                            preferred_element_type=jnp.float32)
    o_ref[0] = (acc + bp_ref[...]).astype(o_ref.dtype)


# ----------------------------------------------------------------------------
# Wrapper
# ----------------------------------------------------------------------------
def _pick_block(n, candidates=(256, 128)):
    for c in candidates:
        if n >= c and n % c == 0:
            return c
    return n   # small / ragged: use the full dimension (always legal)


def differential_attention(x, params, *, num_heads, lambda_init=0.8, eps=1e-5):
    """x: (B, N, C) float32. params in x@W layout (see init_params)."""
    B, N, C = x.shape
    H = num_heads
    assert C % H == 0
    D = C // H
    scale = D ** (-0.5)
    vmem_cap = 64 * 1024 * 1024   # safe on v5e/v6e (128 MiB) and v7x (64 MiB)

    # Scalar glue: lambda_full = exp(sum(lq1*lk1)) - exp(sum(lq2*lk2)) + lambda_init
    lam1 = jnp.exp(jnp.sum(params["lambda_q1"] * params["lambda_k1"]))
    lam2 = jnp.exp(jnp.sum(params["lambda_q2"] * params["lambda_k2"]))
    lam_full = (lam1 - lam2 + lambda_init).reshape(1, 1).astype(jnp.float32)

    # bf16 MXU operands (f32 accumulation inside kernels); head-major weight
    # layouts so per-head blocks are full last-dim views (lane friendly).
    x_bf = x.astype(jnp.bfloat16)
    wqkv_r = params["wqkv"].reshape(C, 5, H, D).transpose(1, 2, 0, 3)  # (5,H,C,D)
    wq12 = wqkv_r[:2].astype(jnp.bfloat16)                             # (2,H,C,D)
    wkv = wqkv_r[2:].astype(jnp.bfloat16)                              # (3,H,C,D)
    wproj_r = params["wproj"].reshape(H, D, C).astype(jnp.bfloat16)    # (H,D,C)
    bproj = params["bproj"].astype(jnp.float32)                        # (1,C)

    blk_n = _pick_block(N)
    nb = N // blk_n

    # ---- Stage 1: QKV projection ------------------------------------------
    q12, kv = pl.pallas_call(
        _qkv_proj_kernel,
        out_shape=(jax.ShapeDtypeStruct((2, B, H, N, D), jnp.bfloat16),
                   jax.ShapeDtypeStruct((3, B, H, N, D), jnp.bfloat16)),
        grid=(B, H, nb),
        in_specs=[
            pl.BlockSpec((1, blk_n, C), lambda b, h, ni: (b, ni, 0)),
            pl.BlockSpec((2, 1, C, D), lambda b, h, ni: (0, h, 0, 0)),
            pl.BlockSpec((3, 1, C, D), lambda b, h, ni: (0, h, 0, 0)),
        ],
        out_specs=(
            pl.BlockSpec((2, 1, 1, blk_n, D), lambda b, h, ni: (0, b, h, ni, 0)),
            pl.BlockSpec((3, 1, 1, blk_n, D), lambda b, h, ni: (0, b, h, ni, 0)),
        ),
        compiler_params=pltpu.CompilerParams(
            dimension_semantics=("parallel", "parallel", "parallel"),
            vmem_limit_bytes=vmem_cap),
        cost_estimate=pl.CostEstimate(
            flops=2 * B * N * C * 5 * C,
            transcendentals=0,
            bytes_accessed=B * H * N * C * 2 + 5 * C * C * 2 + 5 * B * N * C * 2),
    )(x_bf, wq12, wkv)

    # ---- Stage 2: flash-style differential attention -----------------------
    blk_q = _pick_block(N)
    blk_k = _pick_block(N)
    nq, nk = N // blk_q, N // blk_k
    y = pl.pallas_call(
        functools.partial(_flash_diff_kernel, scale=scale),
        out_shape=jax.ShapeDtypeStruct((B, H, N, D), jnp.float32),
        grid=(B, H, nq, nk),
        in_specs=[
            pl.BlockSpec((2, 1, 1, blk_q, D), lambda b, h, qi, ki: (0, b, h, qi, 0)),
            pl.BlockSpec((3, 1, 1, blk_k, D), lambda b, h, qi, ki: (0, b, h, ki, 0)),
            pl.BlockSpec(memory_space=pltpu.SMEM),   # lambda_full scalar
        ],
        out_specs=pl.BlockSpec((1, 1, blk_q, D), lambda b, h, qi, ki: (b, h, qi, 0)),
        scratch_shapes=[
            pltpu.VMEM((blk_q, 1), jnp.float32),     # m1
            pltpu.VMEM((blk_q, 1), jnp.float32),     # l1
            pltpu.VMEM((blk_q, 1), jnp.float32),     # m2
            pltpu.VMEM((blk_q, 1), jnp.float32),     # l2
            pltpu.VMEM((blk_q, D), jnp.float32),     # acc1
            pltpu.VMEM((blk_q, D), jnp.float32),     # acc2
        ],
        compiler_params=pltpu.CompilerParams(
            dimension_semantics=("parallel", "parallel", "parallel", "arbitrary"),
            vmem_limit_bytes=vmem_cap),
        cost_estimate=pl.CostEstimate(
            flops=8 * B * H * N * N * D,
            transcendentals=2 * B * H * N * N,
            bytes_accessed=5 * B * H * N * D * 2 + B * H * N * D * 4),
    )(q12, kv, lam_full)

    # ---- Stage 3: RMSNorm + scale + output projection -----------------------
    out = pl.pallas_call(
        functools.partial(_norm_proj_kernel, lambda_init=lambda_init, eps=eps),
        out_shape=jax.ShapeDtypeStruct((B, N, C), x.dtype),
        grid=(B, nb),
        in_specs=[
            pl.BlockSpec((1, H, blk_n, D), lambda b, ni: (b, 0, ni, 0)),
            pl.BlockSpec((H, D, C), lambda b, ni: (0, 0, 0)),
            pl.BlockSpec((1, C), lambda b, ni: (0, 0)),
        ],
        out_specs=pl.BlockSpec((1, blk_n, C), lambda b, ni: (b, ni, 0)),
        compiler_params=pltpu.CompilerParams(
            dimension_semantics=("parallel", "parallel"),
            vmem_limit_bytes=vmem_cap),
        cost_estimate=pl.CostEstimate(
            flops=2 * B * N * C * C + 4 * B * N * C,
            transcendentals=B * N,
            bytes_accessed=B * N * C * 4 + C * C * 2 + B * N * C * 4),
    )(y, wproj_r, bproj)

    return out


# ----------------------------------------------------------------------------
# Pure-JAX f32 reference (matches the PyTorch forward for num_heads == 2).
# ----------------------------------------------------------------------------
def _reference(x, params, *, num_heads):
    B, N, C = x.shape
    D = C // num_heads
    scale = D ** (-0.5)
    qkv = x @ params["wqkv"]
    qkv = qkv.reshape(B, N, 5, num_heads, D).transpose(2, 0, 3, 1, 4)
    q1, q2, k1, k2, v = qkv[0], qkv[1], qkv[2], qkv[3], qkv[4]
    a1 = jax.nn.softmax(jnp.einsum("bhnd,bhmd->bhnm", q1, k1) * scale, axis=-1)
    a2 = jax.nn.softmax(jnp.einsum("bhnd,bhmd->bhnm", q2, k2) * scale, axis=-1)
    lam1 = jnp.exp(jnp.sum(params["lambda_q1"] * params["lambda_k1"]))
    lam2 = jnp.exp(jnp.sum(params["lambda_q2"] * params["lambda_k2"]))
    lam = lam1 - lam2 + 0.8
    attn = a1 - lam * a2
    y = jnp.einsum("bhnm,bhmd->bhnd", attn, v).transpose(0, 2, 1, 3).reshape(B, N, C)
    y = y * jax.lax.rsqrt(jnp.mean(y * y, axis=-1, keepdims=True) + 1e-5)
    y = y * (1.0 - 0.8)
    return y @ params["wproj"] + params["bproj"][0]


def init_params(key, dim, num_heads):
    D = dim // num_heads
    k1, k2, k3, k4, k5, k6, k7 = jax.random.split(key, 7)
    return {
        "wqkv": jax.random.normal(k1, (dim, 5 * dim), jnp.float32) * 0.02,
        "wproj": jax.random.normal(k2, (dim, dim), jnp.float32) * 0.02,
        "bproj": jax.random.normal(k3, (1, dim), jnp.float32) * 0.02,
        "lambda_q1": jax.random.normal(k4, (D,), jnp.float32) * 0.1,
        "lambda_k1": jax.random.normal(k5, (D,), jnp.float32) * 0.1,
        "lambda_q2": jax.random.normal(k6, (D,), jnp.float32) * 0.1,
        "lambda_k2": jax.random.normal(k7, (D,), jnp.float32) * 0.1,
    }


if __name__ == "__main__":
    B, N, C = 2, 8, 32
    num_heads = 2   # head_dim = 16 -> 2*head_dim == C, matching the module's subln

    key = jax.random.PRNGKey(0)
    kx, kp = jax.random.split(key)
    x = jax.random.normal(kx, (B, N, C), jnp.float32)
    params = init_params(kp, C, num_heads)

    out = differential_attention(x, params, num_heads=num_heads)
    out = jax.block_until_ready(out)

    ref = _reference(x, params, num_heads=num_heads)
    assert out.shape == (B, N, C)
    # bf16 MXU operands (f32 accumulation) vs an all-f32 reference.
    err = jnp.max(jnp.abs(out - ref))
    assert jnp.allclose(out, ref, rtol=3e-3, atol=3e-3), f"max abs err {err}"

    print("KERNEL_OK")
</pallas_src>

<mosaic_0001>
module attributes {stable_mosaic.version = 11 : i64} {
  func.func @_qkv_proj_kernel(%arg0: i32, %arg1: i32, %arg2: i32, %arg3: memref<1x8x32xbf16, #tpu.memory_space<vmem>>, %arg4: memref<2x1x32x16xbf16, #tpu.memory_space<vmem>>, %arg5: memref<3x1x32x16xbf16, #tpu.memory_space<vmem>>, %arg6: memref<2x1x1x8x16xbf16, #tpu.memory_space<vmem>>, %arg7: memref<3x1x1x8x16xbf16, #tpu.memory_space<vmem>>) attributes {dimension_semantics = [#tpu.dimension_semantics<parallel>, #tpu.dimension_semantics<parallel>, #tpu.dimension_semantics<parallel>], iteration_bounds = array<i64: 2, 2, 1>, scalar_prefetch = 0 : i64, scratch_operands = 0 : i64, tpu.core_type = #tpu.core_type<tc>, window_params = [{transform_indices = @transform_0, window_bounds = array<i64: 1, 8, 32>}, {transform_indices = @transform_1, window_bounds = array<i64: 2, 1, 32, 16>}, {transform_indices = @transform_2, window_bounds = array<i64: 3, 1, 32, 16>}, {transform_indices = @transform_3, window_bounds = array<i64: 2, 1, 1, 8, 16>}, {transform_indices = @transform_4, window_bounds = array<i64: 3, 1, 1, 8, 16>}]} {
    %c0 = arith.constant 0 : index
    %c0_0 = arith.constant 0 : index
    %c0_1 = arith.constant 0 : index
    %0 = vector.load %arg3[%c0, %c0_0, %c0_1] : memref<1x8x32xbf16, #tpu.memory_space<vmem>>, vector<1x8x32xbf16>
    %1 = vector.shape_cast %0 : vector<1x8x32xbf16> to vector<8x32xbf16>
    %c0_2 = arith.constant 0 : index
    %c0_3 = arith.constant 0 : index
    %c0_4 = arith.constant 0 : index
    %c0_5 = arith.constant 0 : index
    %2 = vector.load %arg4[%c0_2, %c0_3, %c0_4, %c0_5] : memref<2x1x32x16xbf16, #tpu.memory_space<vmem>>, vector<1x1x32x16xbf16>
    %3 = vector.shape_cast %2 : vector<1x1x32x16xbf16> to vector<32x16xbf16>
    %cst = arith.constant dense<0.000000e+00> : vector<8x16xf32>
    %4 = tpu.matmul %1, %3, %cst {dimension_numbers = #tpu.dot_dimension_numbers<[1], [0], [0], [1], [0, 0, 1, 1], [], []>} : vector<8x32xbf16>, vector<32x16xbf16>, vector<8x16xf32> -> vector<8x16xf32>
    %5 = arith.truncf %4 : vector<8x16xf32> to vector<8x16xbf16>
    %c0_6 = arith.constant 0 : index
    %c0_7 = arith.constant 0 : index
    %c0_8 = arith.constant 0 : index
    %c0_9 = arith.constant 0 : index
    %c0_10 = arith.constant 0 : index
    %6 = vector.load %arg6[%c0_6, %c0_7, %c0_8, %c0_9, %c0_10] : memref<2x1x1x8x16xbf16, #tpu.memory_space<vmem>>, vector<1x1x1x8x16xbf16>
    %7 = vector.shape_cast %6 : vector<1x1x1x8x16xbf16> to vector<8x16xbf16>
    %8 = vector.shape_cast %5 : vector<8x16xbf16> to vector<1x1x1x8x16xbf16>
    tpu.vector_store %arg6[%c0_6, %c0_7, %c0_8, %c0_9, %c0_10], %8 {strides = array<i32>} : memref<2x1x1x8x16xbf16, #tpu.memory_space<vmem>>, vector<1x1x1x8x16xbf16>,
    %c1 = arith.constant 1 : index
    %c0_11 = arith.constant 0 : index
    %c0_12 = arith.constant 0 : index
    %c0_13 = arith.constant 0 : index
    %9 = vector.load %arg4[%c1, %c0_11, %c0_12, %c0_13] : memref<2x1x32x16xbf16, #tpu.memory_space<vmem>>, vector<1x1x32x16xbf16>
    %10 = vector.shape_cast %9 : vector<1x1x32x16xbf16> to vector<32x16xbf16>
    %cst_14 = arith.constant dense<0.000000e+00> : vector<8x16xf32>
    %11 = tpu.matmul %1, %10, %cst_14 {dimension_numbers = #tpu.dot_dimension_numbers<[1], [0], [0], [1], [0, 0, 1, 1], [], []>} : vector<8x32xbf16>, vector<32x16xbf16>, vector<8x16xf32> -> vector<8x16xf32>
    %12 = arith.truncf %11 : vector<8x16xf32> to vector<8x16xbf16>
    %c1_15 = arith.constant 1 : index
    %c0_16 = arith.constant 0 : index
    %c0_17 = arith.constant 0 : index
    %c0_18 = arith.constant 0 : index
    %c0_19 = arith.constant 0 : index
    %13 = vector.load %arg6[%c1_15, %c0_16, %c0_17, %c0_18, %c0_19] : memref<2x1x1x8x16xbf16, #tpu.memory_space<vmem>>, vector<1x1x1x8x16xbf16>
    %14 = vector.shape_cast %13 : vector<1x1x1x8x16xbf16> to vector<8x16xbf16>
    %15 = vector.shape_cast %12 : vector<8x16xbf16> to vector<1x1x1x8x16xbf16>
    tpu.vector_store %arg6[%c1_15, %c0_16, %c0_17, %c0_18, %c0_19], %15 {strides = array<i32>} : memref<2x1x1x8x16xbf16, #tpu.memory_space<vmem>>, vector<1x1x1x8x16xbf16>,
    %c0_20 = arith.constant 0 : index
    %c0_21 = arith.constant 0 : index
    %c0_22 = arith.constant 0 : index
    %c0_23 = arith.constant 0 : index
    %16 = vector.load %arg5[%c0_20, %c0_21, %c0_22, %c0_23] : memref<3x1x32x16xbf16, #tpu.memory_space<vmem>>, vector<1x1x32x16xbf16>
    %17 = vector.shape_cast %16 : vector<1x1x32x16xbf16> to vector<32x16xbf16>
    %cst_24 = arith.constant dense<0.000000e+00> : vector<8x16xf32>
    %18 = tpu.matmul %1, %17, %cst_24 {dimension_numbers = #tpu.dot_dimension_numbers<[1], [0], [0], [1], [0, 0, 1, 1], [], []>} : vector<8x32xbf16>, vector<32x16xbf16>, vector<8x16xf32> -> vector<8x16xf32>
    %19 = arith.truncf %18 : vector<8x16xf32> to vector<8x16xbf16>
    %c0_25 = arith.constant 0 : index
    %c0_26 = arith.constant 0 : index
    %c0_27 = arith.constant 0 : index
    %c0_28 = arith.constant 0 : index
    %c0_29 = arith.constant 0 : index
    %20 = vector.load %arg7[%c0_25, %c0_26, %c0_27, %c0_28, %c0_29] : memref<3x1x1x8x16xbf16, #tpu.memory_space<vmem>>, vector<1x1x1x8x16xbf16>
    %21 = vector.shape_cast %20 : vector<1x1x1x8x16xbf16> to vector<8x16xbf16>
    %22 = vector.shape_cast %19 : vector<8x16xbf16> to vector<1x1x1x8x16xbf16>
    tpu.vector_store %arg7[%c0_25, %c0_26, %c0_27, %c0_28, %c0_29], %22 {strides = array<i32>} : memref<3x1x1x8x16xbf16, #tpu.memory_space<vmem>>, vector<1x1x1x8x16xbf16>,
    %c1_30 = arith.constant 1 : index
    %c0_31 = arith.constant 0 : index
    %c0_32 = arith.constant 0 : index
    %c0_33 = arith.constant 0 : index
    %23 = vector.load %arg5[%c1_30, %c0_31, %c0_32, %c0_33] : memref<3x1x32x16xbf16, #tpu.memory_space<vmem>>, vector<1x1x32x16xbf16>
    %24 = vector.shape_cast %23 : vector<1x1x32x16xbf16> to vector<32x16xbf16>
    %cst_34 = arith.constant dense<0.000000e+00> : vector<8x16xf32>
    %25 = tpu.matmul %1, %24, %cst_34 {dimension_numbers = #tpu.dot_dimension_numbers<[1], [0], [0], [1], [0, 0, 1, 1], [], []>} : vector<8x32xbf16>, vector<32x16xbf16>, vector<8x16xf32> -> vector<8x16xf32>
    %26 = arith.truncf %25 : vector<8x16xf32> to vector<8x16xbf16>
    %c1_35 = arith.constant 1 : index
    %c0_36 = arith.constant 0 : index
    %c0_37 = arith.constant 0 : index
    %c0_38 = arith.constant 0 : index
    %c0_39 = arith.constant 0 : index
    %27 = vector.load %arg7[%c1_35, %c0_36, %c0_37, %c0_38, %c0_39] : memref<3x1x1x8x16xbf16, #tpu.memory_space<vmem>>, vector<1x1x1x8x16xbf16>
    %28 = vector.shape_cast %27 : vector<1x1x1x8x16xbf16> to vector<8x16xbf16>
    %29 = vector.shape_cast %26 : vector<8x16xbf16> to vector<1x1x1x8x16xbf16>
    tpu.vector_store %arg7[%c1_35, %c0_36, %c0_37, %c0_38, %c0_39], %29 {strides = array<i32>} : memref<3x1x1x8x16xbf16, #tpu.memory_space<vmem>>, vector<1x1x1x8x16xbf16>,
    %c2 = arith.constant 2 : index
    %c0_40 = arith.constant 0 : index
    %c0_41 = arith.constant 0 : index
    %c0_42 = arith.constant 0 : index
    %30 = vector.load %arg5[%c2, %c0_40, %c0_41, %c0_42] : memref<3x1x32x16xbf16, #tpu.memory_space<vmem>>, vector<1x1x32x16xbf16>
    %31 = vector.shape_cast %30 : vector<1x1x32x16xbf16> to vector<32x16xbf16>
    %cst_43 = arith.constant dense<0.000000e+00> : vector<8x16xf32>
    %32 = tpu.matmul %1, %31, %cst_43 {dimension_numbers = #tpu.dot_dimension_numbers<[1], [0], [0], [1], [0, 0, 1, 1], [], []>} : vector<8x32xbf16>, vector<32x16xbf16>, vector<8x16xf32> -> vector<8x16xf32>
    %33 = arith.truncf %32 : vector<8x16xf32> to vector<8x16xbf16>
    %c2_44 = arith.constant 2 : index
    %c0_45 = arith.constant 0 : index
    %c0_46 = arith.constant 0 : index
    %c0_47 = arith.constant 0 : index
    %c0_48 = arith.constant 0 : index
    %34 = vector.load %arg7[%c2_44, %c0_45, %c0_46, %c0_47, %c0_48] : memref<3x1x1x8x16xbf16, #tpu.memory_space<vmem>>, vector<1x1x1x8x16xbf16>
    %35 = vector.shape_cast %34 : vector<1x1x1x8x16xbf16> to vector<8x16xbf16>
    %36 = vector.shape_cast %33 : vector<8x16xbf16> to vector<1x1x1x8x16xbf16>
    tpu.vector_store %arg7[%c2_44, %c0_45, %c0_46, %c0_47, %c0_48], %36 {strides = array<i32>} : memref<3x1x1x8x16xbf16, #tpu.memory_space<vmem>>, vector<1x1x1x8x16xbf16>,
    return
  }
  func.func @transform_0(%arg0: i32, %arg1: i32, %arg2: i32) -> (i32, i32, i32) {
    %c0_i32 = arith.constant 0 : i32
    %c0_i32_0 = arith.constant 0 : i32
    return %arg0, %arg2, %c0_i32 : i32, i32, i32
  }
  func.func @transform_1(%arg0: i32, %arg1: i32, %arg2: i32) -> (i32, i32, i32, i32) {
    %c0_i32 = arith.constant 0 : i32
    %c0_i32_0 = arith.constant 0 : i32
    %c0_i32_1 = arith.constant 0 : i32
    %c0_i32_2 = arith.constant 0 : i32
    return %c0_i32, %arg1, %c0_i32_0, %c0_i32_1 : i32, i32, i32, i32
  }
  func.func @transform_2(%arg0: i32, %arg1: i32, %arg2: i32) -> (i32, i32, i32, i32) {
    %c0_i32 = arith.constant 0 : i32
    %c0_i32_0 = arith.constant 0 : i32
    %c0_i32_1 = arith.constant 0 : i32
    %c0_i32_2 = arith.constant 0 : i32
    return %c0_i32, %arg1, %c0_i32_0, %c0_i32_1 : i32, i32, i32, i32
  }
  func.func @transform_3(%arg0: i32, %arg1: i32, %arg2: i32) -> (i32, i32, i32, i32, i32) {
    %c0_i32 = arith.constant 0 : i32
    %c0_i32_0 = arith.constant 0 : i32
    %c0_i32_1 = arith.constant 0 : i32
    return %c0_i32, %arg0, %arg1, %arg2, %c0_i32_0 : i32, i32, i32, i32, i32
  }
  func.func @transform_4(%arg0: i32, %arg1: i32, %arg2: i32) -> (i32, i32, i32, i32, i32) {
    %c0_i32 = arith.constant 0 : i32
    %c0_i32_0 = arith.constant 0 : i32
    %c0_i32_1 = arith.constant 0 : i32
    return %c0_i32, %arg0, %arg1, %arg2, %c0_i32_0 : i32, i32, i32, i32, i32
  }
}

</mosaic_0001>

<llo_original>
// kernel: tpu_custom_call.1
$region0: #{tpu_custom_call.1}
  #allocation0 [shape = 'u32[]', space=smem, size = 0x4, offset = 0x4, fixed_abs, tag = 'smem constant byte address 0x4 - core index']
  #allocation1 [shape = 'u32[144,128]{1,0:T(1,128)}', space=vmem, size = 0x12000, scoped, tag = 'internal scratch']
  %s0 = inlined_call_operand.vmem [shape: bf16[2,8,32], index: 0, kind: input, shape index: {}]
  %s1 = inlined_call_operand.vmem [shape: bf16[2,2,32,16], index: 1, kind: input, shape index: {}]
  %s2 = inlined_call_operand.vmem [shape: bf16[3,2,32,16], index: 2, kind: input, shape index: {}]
  %s3 = inlined_call_operand.hbm [shape: bf16[2,2,2,8,16], index: 3, kind: output, shape index: {0}]
  %s4 = inlined_call_operand.hbm [shape: bf16[3,2,2,8,16], index: 4, kind: output, shape index: {1}]
  %5 = xla_tuple %s3, %s4
  %s6 = sld [smem:[#allocation0]]
  $region135: #{tpu_custom_call.1} parent=0
    _
  %s8 = ssub.s32 1, %s6
  %s9 = scalar_select 0, %s8, %s6
  $region1: #{tpu_custom_call.1} parent=0
    #allocation2 [shape = 'u8[32768]{0}', space=vmem, size = 0x8000, scoped, tag = 'input window, operand 1']
    #allocation3 [shape = 'u8[49152]{0}', space=vmem, size = 0xc000, scoped, tag = 'input window, operand 2']
    #allocation4 [shape = 'u8[8192]{0}', space=vmem, size = 0x2000, scoped, tag = 'output window, operand 0']
    #allocation5 [shape = 's32[2]{0}', space=sflag, size = 0x8, scoped, tag = 'scoped memory for tpu_custom_call.1']
    #allocation6 [shape = 'u8[12288]{0}', space=vmem, size = 0x3000, scoped, tag = 'output window, operand 1']
    #allocation7 [shape = 's32[2]{0}', space=sflag, size = 0x8, scoped, tag = 'scoped memory for tpu_custom_call.1']
    %10 = vsyncpa [#allocation5], 0
    %s11 = scalar_lea.sflag [#allocation5], 1
    %12 = vsyncpa %s11, 0
    %13 = vsyncpa [#allocation7], 0
    %s14 = scalar_lea.sflag [#allocation7], 1
    %15 = vsyncpa %s14, 0
    loop: start=0, step=1, limit=6
    $region2: #{tpu_custom_call.1} parent=1 // loop_pre_header
      _
    $region3: #{tpu_custom_call.1} parent=1 // loop_header
      %s17 = sphi 0, %s21
      %p18 = scmp.ge.s32.totalorder %s17, 6
      %s24 = sphi 0, %s43
      %s25 = sphi 0, %s39
      %s26 = sphi 0, %s35
      %s27 = sphi 0, %s24
      %s28 = sphi 0, %s25
      %s29 = sphi 0, %s26
      %s30 = sphi 0, %s27
      %s31 = sphi 0, %s28
      %s32 = sphi 0, %s29
      %s48 = sphi 0, %s50
      %s51 = sphi 0, %s48
      %s52 = sphi 0, %s51
      %s68 = sphi 0, %s52
      %s74 = sphi 0, %s76
      %s77 = sphi 0, %s74
      %s78 = sphi 0, %s77
      %s94 = sphi 0, %s78
      %s100 = sphi 0, %s102
      %s103 = sphi 0, %s100
      %s104 = sphi 0, %s103
      %s120 = sphi 0, %s104
      %s130 = sphi 0, %s132
      %s133 = sphi 0, %s130
      %s134 = sphi 0, %s133
      %s150 = sphi 0, %s134
      %s160 = sphi 0, %s162
      %s163 = sphi 0, %s160
      %s164 = sphi 0, %s163
      %s180 = sphi 0, %s164
    $region4: #{tpu_custom_call.1} parent=1 // loop_header_branch
      %20 = sbr.rel (%p18) target = $region8
    $region5: #{tpu_custom_call.1} parent=1 // loop_body
      %s22 = ssub.s32 %s17, 1
      %s23 = ssub.s32 %s17, 2
      %s33 = sadd.s32 1, %s26
      %p34 = scmp.ge.s32.totalorder %s33, 1
      %s35 = scalar_select %p34, 0, %s33
      %s36 = sadd.s32 1, %s25
      %s37 = scalar_select %p34, %s36, %s25
      %p38 = scmp.ge.s32.totalorder %s37, 2
      %s39 = scalar_select %p38, 0, %s37
      %s40 = sadd.s32 1, %s24
      %s41 = scalar_select %p38, %s40, %s24
      %p42 = scmp.ge.s32.totalorder %s41, 2
      %s43 = scalar_select %p42, 0, %s41
      %s44 = ssub.s32 %s24, %s43
      %s45 = ssub.s32 %s26, %s35
      %s46 = sor.u32 %s44, %s45
      %p47 = scmp.eq.s32.totalorder %s46, 0
      %s49 = sadd.s32 %s48, 1
      %s50 = scalar_select %p47, %s48, %s49
      %p53 = pneg %p47
      %p54 = scmp.eq.s32.totalorder %s17, 3
      %p55 = por %p53, %p54
      %p56 = scmp.ne.s32.totalorder %s48, %s51
      %p57 = scmp.eq.s32.totalorder %s17, 0
      %p58 = por %p56, %p57
      %p59 = scmp.ne.s32.totalorder %s48, %s51
      %p60 = scmp.eq.s32.totalorder %s22, 3
      %p61 = por %p59, %p60
      %p62 = scmp.ne.s32.totalorder %s51, %s52
      %p63 = scmp.eq.s32.totalorder %s22, 0
      %p64 = por %p62, %p63
      %p65 = scmp.ne.s32.totalorder %s51, %s52
      %p66 = scmp.eq.s32.totalorder %s23, 3
      %p67 = por %p65, %p66
      %p69 = scmp.ne.s32.totalorder %s52, %s68
      %p70 = scmp.eq.s32.totalorder %s23, 0
      %p71 = por %p69, %p70
      %s72 = ssub.s32 %s25, %s39
      %p73 = scmp.eq.s32.totalorder %s72, 0
      %s75 = sadd.s32 %s74, 1
      %s76 = scalar_select %p73, %s74, %s75
      %p79 = pneg %p73
      %p80 = scmp.eq.s32.totalorder %s17, 3
      %p81 = por %p79, %p80
      %p82 = scmp.ne.s32.totalorder %s74, %s77
      %p83 = scmp.eq.s32.totalorder %s17, 0
      %p84 = por %p82, %p83
      %p85 = scmp.ne.s32.totalorder %s74, %s77
      %p86 = scmp.eq.s32.totalorder %s22, 3
      %p87 = por %p85, %p86
      %p88 = scmp.ne.s32.totalorder %s77, %s78
      %p89 = scmp.eq.s32.totalorder %s22, 0
      %p90 = por %p88, %p89
      %p91 = scmp.ne.s32.totalorder %s77, %s78
      %p92 = scmp.eq.s32.totalorder %s23, 3
      %p93 = por %p91, %p92
      %p95 = scmp.ne.s32.totalorder %s78, %s94
      %p96 = scmp.eq.s32.totalorder %s23, 0
      %p97 = por %p95, %p96
      %s98 = ssub.s32 %s25, %s39
      %p99 = scmp.eq.s32.totalorder %s98, 0
      %s101 = sadd.s32 %s100, 1
      %s102 = scalar_select %p99, %s100, %s101
      %p105 = pneg %p99
      %p106 = scmp.eq.s32.totalorder %s17, 3
      %p107 = por %p105, %p106
      %p108 = scmp.ne.s32.totalorder %s100, %s103
      %p109 = scmp.eq.s32.totalorder %s17, 0
      %p110 = por %p108, %p109
      %p111 = scmp.ne.s32.totalorder %s100, %s103
      %p112 = scmp.eq.s32.totalorder %s22, 3
      %p113 = por %p111, %p112
      %p114 = scmp.ne.s32.totalorder %s103, %s104
      %p115 = scmp.eq.s32.totalorder %s22, 0
      %p116 = por %p114, %p115
      %p117 = scmp.ne.s32.totalorder %s103, %s104
      %p118 = scmp.eq.s32.totalorder %s23, 3
      %p119 = por %p117, %p118
      %p121 = scmp.ne.s32.totalorder %s104, %s120
      %p122 = scmp.eq.s32.totalorder %s23, 0
      %p123 = por %p121, %p122
      %s124 = ssub.s32 %s24, %s43
      %s125 = ssub.s32 %s25, %s39
      %s126 = sor.u32 %s124, %s125
      %s127 = ssub.s32 %s26, %s35
      %s128 = sor.u32 %s126, %s127
      %p129 = scmp.eq.s32.totalorder %s128, 0
      %s131 = sadd.s32 %s130, 1
      %s132 = scalar_select %p129, %s130, %s131
      %p135 = pneg %p129
      %p136 = scmp.eq.s32.totalorder %s17, 3
      %p137 = por %p135, %p136
      %p138 = scmp.ne.s32.totalorder %s130, %s133
      %p139 = scmp.eq.s32.totalorder %s17, 0
      %p140 = por %p138, %p139
      %p141 = scmp.ne.s32.totalorder %s130, %s133
      %p142 = scmp.eq.s32.totalorder %s22, 3
      %p143 = por %p141, %p142
      %p144 = scmp.ne.s32.totalorder %s133, %s134
      %p145 = scmp.eq.s32.totalorder %s22, 0
      %p146 = por %p144, %p145
      %p147 = scmp.ne.s32.totalorder %s133, %s134
      %p148 = scmp.eq.s32.totalorder %s23, 3
      %p149 = por %p147, %p148
      %p151 = scmp.ne.s32.totalorder %s134, %s150
      %p152 = scmp.eq.s32.totalorder %s23, 0
      %p153 = por %p151, %p152
      %s154 = ssub.s32 %s24, %s43
      %s155 = ssub.s32 %s25, %s39
      %s156 = sor.u32 %s154, %s155
      %s157 = ssub.s32 %s26, %s35
      %s158 = sor.u32 %s156, %s157
      %p159 = scmp.eq.s32.totalorder %s158, 0
      %s161 = sadd.s32 %s160, 1
      %s162 = scalar_select %p159, %s160, %s161
      %p165 = pneg %p159
      %p166 = scmp.eq.s32.totalorder %s17, 3
      %p167 = por %p165, %p166
      %p168 = scmp.ne.s32.totalorder %s160, %s163
      %p169 = scmp.eq.s32.totalorder %s17, 0
      %p170 = por %p168, %p169
      %p171 = scmp.ne.s32.totalorder %s160, %s163
      %p172 = scmp.eq.s32.totalorder %s22, 3
      %p173 = por %p171, %p172
      %p174 = scmp.ne.s32.totalorder %s163, %s164
      %p175 = scmp.eq.s32.totalorder %s22, 0
      %p176 = por %p174, %p175
      %p177 = scmp.ne.s32.totalorder %s163, %s164
      %p178 = scmp.eq.s32.totalorder %s23, 3
      %p179 = por %p177, %p178
      %p181 = scmp.ne.s32.totalorder %s164, %s180
      %p182 = scmp.eq.s32.totalorder %s23, 0
      %p183 = por %p181, %p182
      %p184 = scmp.le.s32.totalorder 1, %s17
      %p185 = scmp.lt.s32.totalorder %s17, 5
      %p186 = pnand %p184, %p185
      %p187 = pneg %p186
      // Predicated region
      $region9: #{tpu_custom_call.1} parent=5 // pred_check
        _
      $region10: #{tpu_custom_call.1} parent=5 // pred_check_branch
        %189 = sbr.rel (%p186) target = $region12
      $region11: #{tpu_custom_call.1} parent=5 // pred_region
        %s190 = ssub.s32 %s17, 1
      $region12: #{tpu_custom_call.1} parent=5 // pred_fallthru
        _
      %p191 = scmp.lt.s32.totalorder %s17, 4
      // Predicated region
      $region13: #{tpu_custom_call.1} parent=5 // pred_check
        %p192 = pneg %p191
      $region14: #{tpu_custom_call.1} parent=5 // pred_check_branch
        %194 = sbr.rel (%p192) target = $region16
      $region15: #{tpu_custom_call.1} parent=5 // pred_region
        // Predicated region
        $region17: #{tpu_custom_call.1} parent=15 // pred_check
          %p195 = pneg %p58
        $region18: #{tpu_custom_call.1} parent=15 // pred_check_branch
          %197 = sbr.rel (%p195) target = $region20
        $region19: #{tpu_custom_call.1} parent=15 // pred_region
          %p198 = scmp.lt.s32.totalorder %s24, 1
          %s199 = scalar_select %p198, %s24, 1
          %p200 = scmp.lt.s32.totalorder %s26, 0
          %s201 = scalar_select %p200, %s26, 0
          %s202 = sadd.s32 %s201, %s199
          %s203 = smul.addr %s202, 4
          %s204 = scalar_lea.vmem %s0, %s203
        $region20: #{tpu_custom_call.1} parent=15 // pred_fallthru
          _
        // Predicated region
        $region21: #{tpu_custom_call.1} parent=15 // pred_check
          %p205 = pneg %p84
        $region22: #{tpu_custom_call.1} parent=15 // pred_check_branch
          %207 = sbr.rel (%p205) target = $region24
        $region23: #{tpu_custom_call.1} parent=15 // pred_region
          %s208 = sand.u32 %s74, 1
          %s209 = sand.u32 %s74, 1
          %s210 = smul.addr %s209, 32
          %s211 = scalar_lea.vmem [#allocation2], %s210
          %s212 = smul.addr %s25, 4
          %s213 = smul.addr %s212, 4
          %s214 = scalar_lea.vmem %s1, %s213
          // Predicated region
          $region25: #{tpu_custom_call.1} parent=23 // pred_check
            _
          $region26: #{tpu_custom_call.1} parent=23 // pred_check_branch
            %216 = sbr.rel (0) target = $region28
          $region27: #{tpu_custom_call.1} parent=23 // pred_region
            // Predicated region
            $region29: #{tpu_custom_call.1} parent=27 // pred_check
              _
            $region30: #{tpu_custom_call.1} parent=27 // pred_check_branch
              %218 = sbr.rel target = $region32
            $region31: #{tpu_custom_call.1} parent=27 // pred_region
              // Predicated region
              $region44: #{tpu_custom_call.1} parent=31 // pred_check
                _
              $region45: #{tpu_custom_call.1} parent=31 // pred_check_branch
                %248 = sbr.rel (0) target = $region47
              $region46: #{tpu_custom_call.1} parent=31 // pred_region
                loop: start=0, step=1, limit=1
                $region48: #{tpu_custom_call.1} parent=46 // loop_pre_header
                  _
                $region49: #{tpu_custom_call.1} parent=46 // loop_header
                  %s250 = sphi 0, %s254
                  %p251 = scmp.ge.s32.totalorder %s250, 1
                  %s255 = sphi %s214, %s214
                  %s256 = sphi %s211, %s211
                $region50: #{tpu_custom_call.1} parent=46 // loop_header_branch
                  %253 = sbr.rel (%p251) target = $region54
                $region51: #{tpu_custom_call.1} parent=46 // loop_body
                  _
                $region52: #{tpu_custom_call.1} parent=46 // loop_footer
                  %s254 = sadd.s32 1, %s250
                $region53: #{tpu_custom_call.1} parent=46 // loop_footer_branch
                  %249 = sbr.rel target = $region49
                $region54: #{tpu_custom_call.1} parent=46 // loop_exit
                  _
                %s258 = ssub.s32 16, 1
                loop: start=0, step=1, limit=1
                $region55: #{tpu_custom_call.1} parent=46 // loop_pre_header
                  _
                $region56: #{tpu_custom_call.1} parent=46 // loop_header
                  %s260 = sphi 0, %s264
                  %p261 = scmp.ge.s32.totalorder %s260, 1
                  %s265 = sphi %s214, %s214
                  %s266 = sphi %s211, %s211
                $region57: #{tpu_custom_call.1} parent=46 // loop_header_branch
                  %263 = sbr.rel (%p261) target = $region61
                $region58: #{tpu_custom_call.1} parent=46 // loop_body
                  %v267 = vld [vmem:[%s265] sm:%s258]
                  %268 = vst [vmem:[%s266] sm:%s258] %v267
                  %v269 = vld [vmem:[%s265 + $0x4] sm:%s258]
                  %270 = vst [vmem:[%s266 + $0x4] sm:%s258] %v269
                  %v271 = vld [vmem:[%s265 + $0x8] sm:%s258]
                  %272 = vst [vmem:[%s266 + $0x8] sm:%s258] %v271
                  %v273 = vld [vmem:[%s265 + $0xc] sm:%s258]
                  %274 = vst [vmem:[%s266 + $0xc] sm:%s258] %v273
                  %v275 = vld [vmem:[%s265 + $0x20] sm:%s258]
                  %276 = vst [vmem:[%s266 + $0x10] sm:%s258] %v275
                  %v277 = vld [vmem:[%s265 + $0x24] sm:%s258]
                  %278 = vst [vmem:[%s266 + $0x14] sm:%s258] %v277
                  %v279 = vld [vmem:[%s265 + $0x28] sm:%s258]
                  %280 = vst [vmem:[%s266 + $0x18] sm:%s258] %v279
                  %v281 = vld [vmem:[%s265 + $0x2c] sm:%s258]
                  %282 = vst [vmem:[%s266 + $0x1c] sm:%s258] %v281
                $region59: #{tpu_custom_call.1} parent=46 // loop_footer
                  %s264 = sadd.s32 1, %s260
                $region60: #{tpu_custom_call.1} parent=46 // loop_footer_branch
                  %259 = sbr.rel target = $region56
                $region61: #{tpu_custom_call.1} parent=46 // loop_exit
                  _
              $region47: #{tpu_custom_call.1} parent=31 // pred_fallthru
                _
            $region32: #{tpu_custom_call.1} parent=27 // pred_fallthru
              _
            // Predicated region
            $region33: #{tpu_custom_call.1} parent=27 // pred_check
              _
            $region34: #{tpu_custom_call.1} parent=27 // pred_check_branch
              %220 = sbr.rel (0) target = $region36
            $region35: #{tpu_custom_call.1} parent=27 // pred_region
              %s222 = ssub.s32 16, 1
              loop: start=0, step=1, limit=1
              $region37: #{tpu_custom_call.1} parent=35 // loop_pre_header
                _
              $region38: #{tpu_custom_call.1} parent=35 // loop_header
                %s224 = sphi 0, %s228
                %p225 = scmp.ge.s32.totalorder %s224, 1
                %s229 = sphi %s214, %s214
                %s230 = sphi %s211, %s211
              $region39: #{tpu_custom_call.1} parent=35 // loop_header_branch
                %227 = sbr.rel (%p225) target = $region43
              $region40: #{tpu_custom_call.1} parent=35 // loop_body
                %v231 = vld [vmem:[%s229] sm:%s222]
                %232 = vst [vmem:[%s230] sm:%s222] %v231
                %v233 = vld [vmem:[%s229 + $0x4] sm:%s222]
                %234 = vst [vmem:[%s230 + $0x4] sm:%s222] %v233
                %v235 = vld [vmem:[%s229 + $0x8] sm:%s222]
                %236 = vst [vmem:[%s230 + $0x8] sm:%s222] %v235
                %v237 = vld [vmem:[%s229 + $0xc] sm:%s222]
                %238 = vst [vmem:[%s230 + $0xc] sm:%s222] %v237
                %v239 = vld [vmem:[%s229 + $0x20] sm:%s222]
                %240 = vst [vmem:[%s230 + $0x10] sm:%s222] %v239
                %v241 = vld [vmem:[%s229 + $0x24] sm:%s222]
                %242 = vst [vmem:[%s230 + $0x14] sm:%s222] %v241
                %v243 = vld [vmem:[%s229 + $0x28] sm:%s222]
                %244 = vst [vmem:[%s230 + $0x18] sm:%s222] %v243
                %v245 = vld [vmem:[%s229 + $0x2c] sm:%s222]
                %246 = vst [vmem:[%s230 + $0x1c] sm:%s222] %v245
              $region41: #{tpu_custom_call.1} parent=35 // loop_footer
                %s228 = sadd.s32 1, %s224
              $region42: #{tpu_custom_call.1} parent=35 // loop_footer_branch
                %223 = sbr.rel target = $region38
              $region43: #{tpu_custom_call.1} parent=35 // loop_exit
                _
            $region36: #{tpu_custom_call.1} parent=27 // pred_fallthru
              _
          $region28: #{tpu_custom_call.1} parent=23 // pred_fallthru
            _
          %283 = vnop
        $region24: #{tpu_custom_call.1} parent=15 // pred_fallthru
          _
        // Predicated region
        $region62: #{tpu_custom_call.1} parent=15 // pred_check
          %p284 = pneg %p110
        $region63: #{tpu_custom_call.1} parent=15 // pred_check_branch
          %286 = sbr.rel (%p284) target = $region65
        $region64: #{tpu_custom_call.1} parent=15 // pred_region
          %s287 = sand.u32 %s100, 1
          %s288 = sand.u32 %s100, 1
          %s289 = smul.addr %s288, 48
          %s290 = scalar_lea.vmem [#allocation3], %s289
          %s291 = smul.addr %s25, 4
          %s292 = smul.addr %s291, 4
          %s293 = scalar_lea.vmem %s2, %s292
          // Predicated region
          $region66: #{tpu_custom_call.1} parent=64 // pred_check
            _
          $region67: #{tpu_custom_call.1} parent=64 // pred_check_branch
            %295 = sbr.rel (0) target = $region69
          $region68: #{tpu_custom_call.1} parent=64 // pred_region
            // Predicated region
            $region70: #{tpu_custom_call.1} parent=68 // pred_check
              _
            $region71: #{tpu_custom_call.1} parent=68 // pred_check_branch
              %297 = sbr.rel target = $region73
            $region72: #{tpu_custom_call.1} parent=68 // pred_region
              // Predicated region
              $region85: #{tpu_custom_call.1} parent=72 // pred_check
                _
              $region86: #{tpu_custom_call.1} parent=72 // pred_check_branch
                %335 = sbr.rel (0) target = $region88
              $region87: #{tpu_custom_call.1} parent=72 // pred_region
                loop: start=0, step=1, limit=1
                $region89: #{tpu_custom_call.1} parent=87 // loop_pre_header
                  _
                $region90: #{tpu_custom_call.1} parent=87 // loop_header
                  %s337 = sphi 0, %s341
                  %p338 = scmp.ge.s32.totalorder %s337, 1
                  %s342 = sphi %s293, %s293
                  %s343 = sphi %s290, %s290
                $region91: #{tpu_custom_call.1} parent=87 // loop_header_branch
                  %340 = sbr.rel (%p338) target = $region95
                $region92: #{tpu_custom_call.1} parent=87 // loop_body
                  _
                $region93: #{tpu_custom_call.1} parent=87 // loop_footer
                  %s341 = sadd.s32 1, %s337
                $region94: #{tpu_custom_call.1} parent=87 // loop_footer_branch
                  %336 = sbr.rel target = $region90
                $region95: #{tpu_custom_call.1} parent=87 // loop_exit
                  _
                %s345 = ssub.s32 16, 1
                loop: start=0, step=1, limit=1
                $region96: #{tpu_custom_call.1} parent=87 // loop_pre_header
                  _
                $region97: #{tpu_custom_call.1} parent=87 // loop_header
                  %s347 = sphi 0, %s351
                  %p348 = scmp.ge.s32.totalorder %s347, 1
                  %s352 = sphi %s293, %s293
                  %s353 = sphi %s290, %s290
                $region98: #{tpu_custom_call.1} parent=87 // loop_header_branch
                  %350 = sbr.rel (%p348) target = $region102
                $region99: #{tpu_custom_call.1} parent=87 // loop_body
                  %v354 = vld [vmem:[%s352] sm:%s345]
                  %355 = vst [vmem:[%s353] sm:%s345] %v354
                  %v356 = vld [vmem:[%s352 + $0x4] sm:%s345]
                  %357 = vst [vmem:[%s353 + $0x4] sm:%s345] %v356
                  %v358 = vld [vmem:[%s352 + $0x8] sm:%s345]
                  %359 = vst [vmem:[%s353 + $0x8] sm:%s345] %v358
                  %v360 = vld [vmem:[%s352 + $0xc] sm:%s345]
                  %361 = vst [vmem:[%s353 + $0xc] sm:%s345] %v360
                  %v362 = vld [vmem:[%s352 + $0x20] sm:%s345]
                  %363 = vst [vmem:[%s353 + $0x10] sm:%s345] %v362
                  %v364 = vld [vmem:[%s352 + $0x24] sm:%s345]
                  %365 = vst [vmem:[%s353 + $0x14] sm:%s345] %v364
                  %v366 = vld [vmem:[%s352 + $0x28] sm:%s345]
                  %367 = vst [vmem:[%s353 + $0x18] sm:%s345] %v366
                  %v368 = vld [vmem:[%s352 + $0x2c] sm:%s345]
                  %369 = vst [vmem:[%s353 + $0x1c] sm:%s345] %v368
                  %v370 = vld [vmem:[%s352 + $0x40] sm:%s345]
                  %371 = vst [vmem:[%s353 + $0x20] sm:%s345] %v370
                  %v372 = vld [vmem:[%s352 + $0x44] sm:%s345]
                  %373 = vst [vmem:[%s353 + $0x24] sm:%s345] %v372
                  %v374 = vld [vmem:[%s352 + $0x48] sm:%s345]
                  %375 = vst [vmem:[%s353 + $0x28] sm:%s345] %v374
                  %v376 = vld [vmem:[%s352 + $0x4c] sm:%s345]
                  %377 = vst [vmem:[%s353 + $0x2c] sm:%s345] %v376
                $region100: #{tpu_custom_call.1} parent=87 // loop_footer
                  %s351 = sadd.s32 1, %s347
                $region101: #{tpu_custom_call.1} parent=87 // loop_footer_branch
                  %346 = sbr.rel target = $region97
                $region102: #{tpu_custom_call.1} parent=87 // loop_exit
                  _
              $region88: #{tpu_custom_call.1} parent=72 // pred_fallthru
                _
            $region73: #{tpu_custom_call.1} parent=68 // pred_fallthru
              _
            // Predicated region
            $region74: #{tpu_custom_call.1} parent=68 // pred_check
              _
            $region75: #{tpu_custom_call.1} parent=68 // pred_check_branch
              %299 = sbr.rel (0) target = $region77
            $region76: #{tpu_custom_call.1} parent=68 // pred_region
              %s301 = ssub.s32 16, 1
              loop: start=0, step=1, limit=1
              $region78: #{tpu_custom_call.1} parent=76 // loop_pre_header
                _
              $region79: #{tpu_custom_call.1} parent=76 // loop_header
                %s303 = sphi 0, %s307
                %p304 = scmp.ge.s32.totalorder %s303, 1
                %s308 = sphi %s293, %s293
                %s309 = sphi %s290, %s290
              $region80: #{tpu_custom_call.1} parent=76 // loop_header_branch
                %306 = sbr.rel (%p304) target = $region84
              $region81: #{tpu_custom_call.1} parent=76 // loop_body
                %v310 = vld [vmem:[%s308] sm:%s301]
                %311 = vst [vmem:[%s309] sm:%s301] %v310
                %v312 = vld [vmem:[%s308 + $0x4] sm:%s301]
                %313 = vst [vmem:[%s309 + $0x4] sm:%s301] %v312
                %v314 = vld [vmem:[%s308 + $0x8] sm:%s301]
                %315 = vst [vmem:[%s309 + $0x8] sm:%s301] %v314
                %v316 = vld [vmem:[%s308 + $0xc] sm:%s301]
                %317 = vst [vmem:[%s309 + $0xc] sm:%s301] %v316
                %v318 = vld [vmem:[%s308 + $0x20] sm:%s301]
                %319 = vst [vmem:[%s309 + $0x10] sm:%s301] %v318
                %v320 = vld [vmem:[%s308 + $0x24] sm:%s301]
                %321 = vst [vmem:[%s309 + $0x14] sm:%s301] %v320
                %v322 = vld [vmem:[%s308 + $0x28] sm:%s301]
                %323 = vst [vmem:[%s309 + $0x18] sm:%s301] %v322
                %v324 = vld [vmem:[%s308 + $0x2c] sm:%s301]
                %325 = vst [vmem:[%s309 + $0x1c] sm:%s301] %v324
                %v326 = vld [vmem:[%s308 + $0x40] sm:%s301]
                %327 = vst [vmem:[%s309 + $0x20] sm:%s301] %v326
                %v328 = vld [vmem:[%s308 + $0x44] sm:%s301]
                %329 = vst [vmem:[%s309 + $0x24] sm:%s301] %v328
                %v330 = vld [vmem:[%s308 + $0x48] sm:%s301]
                %331 = vst [vmem:[%s309 + $0x28] sm:%s301] %v330
                %v332 = vld [vmem:[%s308 + $0x4c] sm:%s301]
                %333 = vst [vmem:[%s309 + $0x2c] sm:%s301] %v332
              $region82: #{tpu_custom_call.1} parent=76 // loop_footer
                %s307 = sadd.s32 1, %s303
              $region83: #{tpu_custom_call.1} parent=76 // loop_footer_branch
                %302 = sbr.rel target = $region79
              $region84: #{tpu_custom_call.1} parent=76 // loop_exit
                _
            $region77: #{tpu_custom_call.1} parent=68 // pred_fallthru
              _
          $region69: #{tpu_custom_call.1} parent=64 // pred_fallthru
            _
          %378 = vnop
        $region65: #{tpu_custom_call.1} parent=15 // pred_fallthru
          _
      $region16: #{tpu_custom_call.1} parent=5 // pred_fallthru
        _
      %p379 = scmp.le.s32.totalorder 1, %s17
      %p380 = scmp.lt.s32.totalorder %s17, 5
      %p381 = pnand %p379, %p380
      %p382 = pneg %p381
      // Predicated region
      $region103: #{tpu_custom_call.1} parent=5 // pred_check
        _
      $region104: #{tpu_custom_call.1} parent=5 // pred_check_branch
        %384 = sbr.rel (%p381) target = $region106
      $region105: #{tpu_custom_call.1} parent=5 // pred_region
        %s385 = ssub.s32 %s17, 1
        %s386 = sand.u32 %s77, 1
        %s387 = sand.u32 %s77, 1
        %s388 = smul.addr %s387, 32
        %s389 = scalar_lea.vmem [#allocation2], %s388
        // Predicated region
        $region107: #{tpu_custom_call.1} parent=105 // pred_check
          %p390 = pneg %p90
        $region108: #{tpu_custom_call.1} parent=105 // pred_check_branch
          %392 = sbr.rel (%p390) target = $region110
        $region109: #{tpu_custom_call.1} parent=105 // pred_region
          _
        $region110: #{tpu_custom_call.1} parent=105 // pred_fallthru
          _
        %s393 = sand.u32 %s103, 1
        %s394 = sand.u32 %s103, 1
        %s395 = smul.addr %s394, 48
        %s396 = scalar_lea.vmem [#allocation3], %s395
        // Predicated region
        $region111: #{tpu_custom_call.1} parent=105 // pred_check
          %p397 = pneg %p116
        $region112: #{tpu_custom_call.1} parent=105 // pred_check_branch
          %399 = sbr.rel (%p397) target = $region114
        $region113: #{tpu_custom_call.1} parent=105 // pred_region
          _
        $region114: #{tpu_custom_call.1} parent=105 // pred_fallthru
          _
        %p400 = scmp.lt.s32.totalorder %s27, 1
        %s401 = scalar_select %p400, %s27, 1
        %p402 = scmp.lt.s32.totalorder %s29, 0
        %s403 = scalar_select %p402, %s29, 0
        %s404 = sadd.s32 %s403, %s401
        %s405 = smul.addr %s404, 4
        %s406 = scalar_lea.vmem %s0, %s405
        %p407 = pneg %p64
        %p408 = pneg %p61
        %s409 = sand.u32 %s77, 1
        %s410 = sand.u32 %s77, 1
        %s411 = smul.addr %s410, 32
        %s412 = scalar_lea.vmem [#allocation2], %s411
        %p413 = pneg %p90
        %p414 = pneg %p87
        %s415 = sand.u32 %s103, 1
        %s416 = sand.u32 %s103, 1
        %s417 = smul.addr %s416, 48
        %s418 = scalar_lea.vmem [#allocation3], %s417
        %p419 = pneg %p116
        %p420 = pneg %p113
        %p421 = pneg %p146
        %p422 = pneg %p143
        %s423 = sand.u32 %s133, 1
        %s424 = scalar_lea.sflag [#allocation5], %s423
        %s425 = sand.u32 %s133, 1
        %s426 = smul.addr %s425, 8
        %s427 = scalar_lea.vmem [#allocation4], %s426
        %p428 = pneg %p176
        %p429 = pneg %p173
        %s430 = sand.u32 %s163, 1
        %s431 = scalar_lea.sflag [#allocation7], %s430
        %s432 = sand.u32 %s163, 1
        %s433 = smul.addr %s432, 12
        %s434 = scalar_lea.vmem [#allocation6], %s433
        %p435 = scmp.lt.s32.totalorder %s27, 1
        %s436 = scalar_select %p435, %s27, 1
        %p437 = scmp.lt.s32.totalorder %s29, 0
        %s438 = scalar_select %p437, %s29, 0
        %s439 = sadd.s32 %s438, %s436
        %s440 = smul.addr %s439, 4
        %s441 = scalar_lea.vmem %s0, %s440
        %v443 = vld [vmem:[%s441] sm:$0xf]
        %v444 = vld [vmem:[%s389] sm:$0xf]
        %v445 = vld [vmem:[%s389 + $0x4] sm:$0xf]
        %v446 = vld [vmem:[%s389 + $0x8] sm:$0xf]
        %v447 = vld [vmem:[%s389 + $0xc] sm:$0xf]
        %v452 = vunpack.c.l.b16 %v444
        %v453 = vunpack.c.l.b16 %v445
        %v454 = vunpack.c.l.b16 %v446
        %v455 = vunpack.c.l.b16 %v447
        %v456 = vpack.c.b16 %v453, %v452
        %v457 = vpack.c.b16 %v455, %v454
        %vm460 = vcmask 261120
        %v462 = vsel %vm460, %v443, 0
        %464 = vmatprep.subr.bf16.mxu0 0
        %465 = vmatpush1.bf16.msra.mxu0 0
        %466 = vmatprep.subr.bf16.mxu0 0
        %467 = vmatpush1.bf16.msra.mxu0 0
        %468 = vmatprep.subr.bf16.mxu0 0
        %469 = vmatpush1.bf16.msra.mxu0 0
        %470 = vmatprep.subr.bf16.mxu0 0
        %471 = vmatpush1.bf16.msra.mxu0 0
        %472 = vmatprep.subr.bf16.mxu0 0
        %473 = vmatpush1.bf16.msra.mxu0 0
        %474 = vmatprep.subr.bf16.mxu0 0
        %475 = vmatpush1.bf16.msra.mxu0 0
        %476 = vmatprep.subr.bf16.mxu0 0
        %477 = vmatpush1.bf16.msra.mxu0 %v457
        %478 = vmatprep.subr.bf16.mxu0 0
        %479 = vmatpush1.bf16.msra.mxu0 %v456
        %480 = vmatprep.subr.bf16.mxu0 0
        %481 = vmatpush2.bf16.msra.mxu0 0
        %482 = vmatprep.subr.bf16.mxu0 0
        %483 = vmatpush2.bf16.msra.mxu0 0
        %484 = vmatprep.subr.bf16.mxu0 0
        %485 = vmatpush2.bf16.msra.mxu0 0
        %486 = vmatprep.subr.bf16.mxu0 0
        %487 = vmatpush2.bf16.msra.mxu0 0
        %488 = vmatprep.subr.bf16.mxu0 0
        %489 = vmatpush2.bf16.msra.mxu0 0
        %490 = vmatprep.subr.bf16.mxu0 0
        %491 = vmatpush2.bf16.msra.mxu0 0
        %492 = vmatprep.subr.bf16.mxu0 0
        %493 = vmatpush2.bf16.msra.mxu0 0
        %494 = vmatprep.subr.bf16.mxu0 0
        %495 = vmatpush2.bf16.msra.mxu0 0
        %496 = vmatprep.mubr.bf16.mxu0 0
        %497 = vmatmul.mubr.bf16.gmra.mxu0 %v462
        %v498 = vpop.f32.mrf.mxu0
        %v499 = vadd.f32 0.0, %v498
        %v500 = vpop.f32.mrf.mxu0
        %v501 = vpop.f32.mrf.mxu0
        %v502 = vpop.f32.mrf.mxu0
        %503 = vdwg.mxu0
        %v504 = vpack.c.bf16 %v499, %v499
        %vm505 = vcmask 125952
        %506 = vst.msk [vmem:[%s427] sm:$0xf] %vm505, %v504
        %s507 = scalar_lea.vmem %s389, 16 [#allocation2]
        %v508 = vld [vmem:[%s507] sm:$0xf]
        %v509 = vld [vmem:[%s507 + $0x4] sm:$0xf]
        %v510 = vld [vmem:[%s507 + $0x8] sm:$0xf]
        %v511 = vld [vmem:[%s507 + $0xc] sm:$0xf]
        %v516 = vunpack.c.l.b16 %v508
        %v517 = vunpack.c.l.b16 %v509
        %v518 = vunpack.c.l.b16 %v510
        %v519 = vunpack.c.l.b16 %v511
        %v520 = vpack.c.b16 %v517, %v516
        %v521 = vpack.c.b16 %v519, %v518
        %524 = vmatprep.subr.bf16.mxu0 0
        %525 = vmatpush1.bf16.msra.mxu0 0
        %526 = vmatprep.subr.bf16.mxu0 0
        %527 = vmatpush1.bf16.msra.mxu0 0
        %528 = vmatprep.subr.bf16.mxu0 0
        %529 = vmatpush1.bf16.msra.mxu0 0
        %530 = vmatprep.subr.bf16.mxu0 0
        %531 = vmatpush1.bf16.msra.mxu0 0
        %532 = vmatprep.subr.bf16.mxu0 0
        %533 = vmatpush1.bf16.msra.mxu0 0
        %534 = vmatprep.subr.bf16.mxu0 0
        %535 = vmatpush1.bf16.msra.mxu0 0
        %536 = vmatprep.subr.bf16.mxu0 0
        %537 = vmatpush1.bf16.msra.mxu0 %v521
        %538 = vmatprep.subr.bf16.mxu0 0
        %539 = vmatpush1.bf16.msra.mxu0 %v520
        %540 = vmatprep.subr.bf16.mxu0 0
        %541 = vmatpush2.bf16.msra.mxu0 0
        %542 = vmatprep.subr.bf16.mxu0 0
        %543 = vmatpush2.bf16.msra.mxu0 0
        %544 = vmatprep.subr.bf16.mxu0 0
        %545 = vmatpush2.bf16.msra.mxu0 0
        %546 = vmatprep.subr.bf16.mxu0 0
        %547 = vmatpush2.bf16.msra.mxu0 0
        %548 = vmatprep.subr.bf16.mxu0 0
        %549 = vmatpush2.bf16.msra.mxu0 0
        %550 = vmatprep.subr.bf16.mxu0 0
        %551 = vmatpush2.bf16.msra.mxu0 0
        %552 = vmatprep.subr.bf16.mxu0 0
        %553 = vmatpush2.bf16.msra.mxu0 0
        %554 = vmatprep.subr.bf16.mxu0 0
        %555 = vmatpush2.bf16.msra.mxu0 0
        %556 = vmatprep.mubr.bf16.mxu0 0
        %557 = vmatmul.mubr.bf16.gmra.mxu0 %v462
        %v558 = vpop.f32.mrf.mxu0
        %v559 = vadd.f32 0.0, %v558
        %v560 = vpop.f32.mrf.mxu0
        %v561 = vpop.f32.mrf.mxu0
        %v562 = vpop.f32.mrf.mxu0
        %563 = vdwg.mxu0
        %v564 = vpack.c.bf16 %v559, %v559
        %s565 = scalar_lea.vmem %s427, 4 [#allocation4]
        %566 = vst.msk [vmem:[%s565] sm:$0xf] %vm505, %v564
        %v567 = vld [vmem:[%s396] sm:$0xf]
        %v568 = vld [vmem:[%s396 + $0x4] sm:$0xf]
        %v569 = vld [vmem:[%s396 + $0x8] sm:$0xf]
        %v570 = vld [vmem:[%s396 + $0xc] sm:$0xf]
        %v575 = vunpack.c.l.b16 %v567
        %v576 = vunpack.c.l.b16 %v568
        %v577 = vunpack.c.l.b16 %v569
        %v578 = vunpack.c.l.b16 %v570
        %v579 = vpack.c.b16 %v576, %v575
        %v580 = vpack.c.b16 %v578, %v577
        %583 = vmatprep.subr.bf16.mxu0 0
        %584 = vmatpush1.bf16.msra.mxu0 0
        %585 = vmatprep.subr.bf16.mxu0 0
        %586 = vmatpush1.bf16.msra.mxu0 0
        %587 = vmatprep.subr.bf16.mxu0 0
        %588 = vmatpush1.bf16.msra.mxu0 0
        %589 = vmatprep.subr.bf16.mxu0 0
        %590 = vmatpush1.bf16.msra.mxu0 0
        %591 = vmatprep.subr.bf16.mxu0 0
        %592 = vmatpush1.bf16.msra.mxu0 0
        %593 = vmatprep.subr.bf16.mxu0 0
        %594 = vmatpush1.bf16.msra.mxu0 0
        %595 = vmatprep.subr.bf16.mxu0 0
        %596 = vmatpush1.bf16.msra.mxu0 %v580
        %597 = vmatprep.subr.bf16.mxu0 0
        %598 = vmatpush1.bf16.msra.mxu0 %v579
        %599 = vmatprep.subr.bf16.mxu0 0
        %600 = vmatpush2.bf16.msra.mxu0 0
        %601 = vmatprep.subr.bf16.mxu0 0
        %602 = vmatpush2.bf16.msra.mxu0 0
        %603 = vmatprep.subr.bf16.mxu0 0
        %604 = vmatpush2.bf16.msra.mxu0 0
        %605 = vmatprep.subr.bf16.mxu0 0
        %606 = vmatpush2.bf16.msra.mxu0 0
        %607 = vmatprep.subr.bf16.mxu0 0
        %608 = vmatpush2.bf16.msra.mxu0 0
        %609 = vmatprep.subr.bf16.mxu0 0
        %610 = vmatpush2.bf16.msra.mxu0 0
        %611 = vmatprep.subr.bf16.mxu0 0
        %612 = vmatpush2.bf16.msra.mxu0 0
        %613 = vmatprep.subr.bf16.mxu0 0
        %614 = vmatpush2.bf16.msra.mxu0 0
        %615 = vmatprep.mubr.bf16.mxu0 0
        %616 = vmatmul.mubr.bf16.gmra.mxu0 %v462
        %v617 = vpop.f32.mrf.mxu0
        %v618 = vadd.f32 0.0, %v617
        %v619 = vpop.f32.mrf.mxu0
        %v620 = vpop.f32.mrf.mxu0
        %v621 = vpop.f32.mrf.mxu0
        %622 = vdwg.mxu0
        %v623 = vpack.c.bf16 %v618, %v618
        %624 = vst.msk [vmem:[%s434] sm:$0xf] %vm505, %v623
        %s625 = scalar_lea.vmem %s396, 16 [#allocation3]
        %v626 = vld [vmem:[%s625] sm:$0xf]
        %v627 = vld [vmem:[%s625 + $0x4] sm:$0xf]
        %v628 = vld [vmem:[%s625 + $0x8] sm:$0xf]
        %v629 = vld [vmem:[%s625 + $0xc] sm:$0xf]
        %v634 = vunpack.c.l.b16 %v626
        %v635 = vunpack.c.l.b16 %v627
        %v636 = vunpack.c.l.b16 %v628
        %v637 = vunpack.c.l.b16 %v629
        %v638 = vpack.c.b16 %v635, %v634
        %v639 = vpack.c.b16 %v637, %v636
        %642 = vmatprep.subr.bf16.mxu0 0
        %643 = vmatpush1.bf16.msra.mxu0 0
        %644 = vmatprep.subr.bf16.mxu0 0
        %645 = vmatpush1.bf16.msra.mxu0 0
        %646 = vmatprep.subr.bf16.mxu0 0
        %647 = vmatpush1.bf16.msra.mxu0 0
        %648 = vmatprep.subr.bf16.mxu0 0
        %649 = vmatpush1.bf16.msra.mxu0 0
        %650 = vmatprep.subr.bf16.mxu0 0
        %651 = vmatpush1.bf16.msra.mxu0 0
        %652 = vmatprep.subr.bf16.mxu0 0
        %653 = vmatpush1.bf16.msra.mxu0 0
        %654 = vmatprep.subr.bf16.mxu0 0
        %655 = vmatpush1.bf16.msra.mxu0 %v639
        %656 = vmatprep.subr.bf16.mxu0 0
        %657 = vmatpush1.bf16.msra.mxu0 %v638
        %658 = vmatprep.subr.bf16.mxu0 0
        %659 = vmatpush2.bf16.msra.mxu0 0
        %660 = vmatprep.subr.bf16.mxu0 0
        %661 = vmatpush2.bf16.msra.mxu0 0
        %662 = vmatprep.subr.bf16.mxu0 0
        %663 = vmatpush2.bf16.msra.mxu0 0
        %664 = vmatprep.subr.bf16.mxu0 0
        %665 = vmatpush2.bf16.msra.mxu0 0
        %666 = vmatprep.subr.bf16.mxu0 0
        %667 = vmatpush2.bf16.msra.mxu0 0
        %668 = vmatprep.subr.bf16.mxu0 0
        %669 = vmatpush2.bf16.msra.mxu0 0
        %670 = vmatprep.subr.bf16.mxu0 0
        %671 = vmatpush2.bf16.msra.mxu0 0
        %672 = vmatprep.subr.bf16.mxu0 0
        %673 = vmatpush2.bf16.msra.mxu0 0
        %674 = vmatprep.mubr.bf16.mxu0 0
        %675 = vmatmul.mubr.bf16.gmra.mxu0 %v462
        %v676 = vpop.f32.mrf.mxu0
        %v677 = vadd.f32 0.0, %v676
        %v678 = vpop.f32.mrf.mxu0
        %v679 = vpop.f32.mrf.mxu0
        %v680 = vpop.f32.mrf.mxu0
        %681 = vdwg.mxu0
        %v682 = vpack.c.bf16 %v677, %v677
        %s683 = scalar_lea.vmem %s434, 4 [#allocation6]
        %684 = vst.msk [vmem:[%s683] sm:$0xf] %vm505, %v682
        %s685 = scalar_lea.vmem %s396, 32 [#allocation3]
        %v686 = vld [vmem:[%s685] sm:$0xf]
        %v687 = vld [vmem:[%s685 + $0x4] sm:$0xf]
        %v688 = vld [vmem:[%s685 + $0x8] sm:$0xf]
        %v689 = vld [vmem:[%s685 + $0xc] sm:$0xf]
        %v694 = vunpack.c.l.b16 %v686
        %v695 = vunpack.c.l.b16 %v687
        %v696 = vunpack.c.l.b16 %v688
        %v697 = vunpack.c.l.b16 %v689
        %v698 = vpack.c.b16 %v695, %v694
        %v699 = vpack.c.b16 %v697, %v696
        %702 = vmatprep.subr.bf16.mxu0 0
        %703 = vmatpush1.bf16.msra.mxu0 0
        %704 = vmatprep.subr.bf16.mxu0 0
        %705 = vmatpush1.bf16.msra.mxu0 0
        %706 = vmatprep.subr.bf16.mxu0 0
        %707 = vmatpush1.bf16.msra.mxu0 0
        %708 = vmatprep.subr.bf16.mxu0 0
        %709 = vmatpush1.bf16.msra.mxu0 0
        %710 = vmatprep.subr.bf16.mxu0 0
        %711 = vmatpush1.bf16.msra.mxu0 0
        %712 = vmatprep.subr.bf16.mxu0 0
        %713 = vmatpush1.bf16.msra.mxu0 0
        %714 = vmatprep.subr.bf16.mxu0 0
        %715 = vmatpush1.bf16.msra.mxu0 %v699
        %716 = vmatprep.subr.bf16.mxu0 0
        %717 = vmatpush1.bf16.msra.mxu0 %v698
        %718 = vmatprep.subr.bf16.mxu0 0
        %719 = vmatpush2.bf16.msra.mxu0 0
        %720 = vmatprep.subr.bf16.mxu0 0
        %721 = vmatpush2.bf16.msra.mxu0 0
        %722 = vmatprep.subr.bf16.mxu0 0
        %723 = vmatpush2.bf16.msra.mxu0 0
        %724 = vmatprep.subr.bf16.mxu0 0
        %725 = vmatpush2.bf16.msra.mxu0 0
        %726 = vmatprep.subr.bf16.mxu0 0
        %727 = vmatpush2.bf16.msra.mxu0 0
        %728 = vmatprep.subr.bf16.mxu0 0
        %729 = vmatpush2.bf16.msra.mxu0 0
        %730 = vmatprep.subr.bf16.mxu0 0
        %731 = vmatpush2.bf16.msra.mxu0 0
        %732 = vmatprep.subr.bf16.mxu0 0
        %733 = vmatpush2.bf16.msra.mxu0 0
        %734 = vmatprep.mubr.bf16.mxu0 0
        %735 = vmatmul.mubr.bf16.gmra.mxu0 %v462
        %v736 = vpop.f32.mrf.mxu0
        %v737 = vadd.f32 0.0, %v736
        %v738 = vpop.f32.mrf.mxu0
        %v739 = vpop.f32.mrf.mxu0
        %v740 = vpop.f32.mrf.mxu0
        %741 = vdwg.mxu0
        %v742 = vpack.c.bf16 %v737, %v737
        %s743 = scalar_lea.vmem %s434, 8 [#allocation6]
        %744 = vst.msk [vmem:[%s743] sm:$0xf] %vm505, %v742
        %s745 = sand.u32 %s133, 1
        %s746 = scalar_lea.sflag [#allocation5], %s745
        %s747 = sand.u32 %s133, 1
        %s748 = smul.addr %s747, 8
        %s749 = scalar_lea.vmem [#allocation4], %s748
        %s750 = sand.u32 %s163, 1
        %s751 = scalar_lea.sflag [#allocation7], %s750
        %s752 = sand.u32 %s163, 1
        %s753 = smul.addr %s752, 12
        %s754 = scalar_lea.vmem [#allocation6], %s753
        // Predicated region
        $region115: #{tpu_custom_call.1} parent=105 // pred_check
          %p755 = pneg %p143
        $region116: #{tpu_custom_call.1} parent=105 // pred_check_branch
          %757 = sbr.rel (%p755) target = $region118
        $region117: #{tpu_custom_call.1} parent=105 // pred_region
          %s759 = ssub.s32 128, 128
          %760 = vsyncadd %s746, %s759
          %s761 = sadd.s32 %s29, %s28
          %s762 = smul.addr %s27, 2
          %s763 = sadd.s32 %s761, %s762
          %s764 = smul.addr %s763, 64
          %s765 = scalar_lea.hbm %s3, %s764
          %s766 = sshll.u32 %s749, 4
          %s767 = int_to_ptr.vmem [resolvable:$true] %s766
          %772 = dma.vmem_to_hbm [thread:$0]  %s767, 128, %s765, %s746, 64, 256, 4
        $region118: #{tpu_custom_call.1} parent=105 // pred_fallthru
          _
        // Predicated region
        $region119: #{tpu_custom_call.1} parent=105 // pred_check
          %p773 = pneg %p173
        $region120: #{tpu_custom_call.1} parent=105 // pred_check_branch
          %775 = sbr.rel (%p773) target = $region122
        $region121: #{tpu_custom_call.1} parent=105 // pred_region
          %s777 = ssub.s32 192, 192
          %778 = vsyncadd %s751, %s777
          %s779 = sadd.s32 %s29, %s28
          %s780 = smul.addr %s27, 2
          %s781 = sadd.s32 %s779, %s780
          %s782 = smul.addr %s781, 64
          %s783 = scalar_lea.hbm %s4, %s782
          %s784 = sshll.u32 %s754, 4
          %s785 = int_to_ptr.vmem [resolvable:$true] %s784
          %790 = dma.vmem_to_hbm [thread:$0]  %s785, 192, %s783, %s751, 64, 256, 4
        $region122: #{tpu_custom_call.1} parent=105 // pred_fallthru
          _
      $region106: #{tpu_custom_call.1} parent=5 // pred_fallthru
        _
      %p791 = scmp.le.s32.totalorder 2, %s17
      // Predicated region
      $region123: #{tpu_custom_call.1} parent=5 // pred_check
        %p792 = pneg %p791
      $region124: #{tpu_custom_call.1} parent=5 // pred_check_branch
        %794 = sbr.rel (%p792) target = $region126
      $region125: #{tpu_custom_call.1} parent=5 // pred_region
        %s795 = ssub.s32 %s17, 2
        // Predicated region
        $region127: #{tpu_custom_call.1} parent=125 // pred_check
          %p796 = pneg %p149
        $region128: #{tpu_custom_call.1} parent=125 // pred_check_branch
          %798 = sbr.rel (%p796) target = $region130
        $region129: #{tpu_custom_call.1} parent=125 // pred_region
          %s799 = sand.u32 %s134, 1
          %s800 = scalar_lea.sflag [#allocation5], %s799
          %s801 = sand.u32 %s134, 1
          %s802 = smul.addr %s801, 8
          %s803 = scalar_lea.vmem [#allocation4], %s802
          %804 = dma.done %s800, 128
        $region130: #{tpu_custom_call.1} parent=125 // pred_fallthru
          _
        // Predicated region
        $region131: #{tpu_custom_call.1} parent=125 // pred_check
          %p805 = pneg %p179
        $region132: #{tpu_custom_call.1} parent=125 // pred_check_branch
          %807 = sbr.rel (%p805) target = $region134
        $region133: #{tpu_custom_call.1} parent=125 // pred_region
          %s808 = sand.u32 %s164, 1
          %s809 = scalar_lea.sflag [#allocation7], %s808
          %s810 = sand.u32 %s164, 1
          %s811 = smul.addr %s810, 12
          %s812 = scalar_lea.vmem [#allocation6], %s811
          %813 = dma.done %s809, 192
        $region134: #{tpu_custom_call.1} parent=125 // pred_fallthru
          _
      $region126: #{tpu_custom_call.1} parent=5 // pred_fallthru
        _
    $region6: #{tpu_custom_call.1} parent=1 // loop_footer
      %s21 = sadd.s32 1, %s17
    $region7: #{tpu_custom_call.1} parent=1 // loop_footer_branch
      %16 = sbr.rel target = $region3
    $region8: #{tpu_custom_call.1} parent=1 // loop_exit
      _
    %814 = vsyncpa [#allocation5], 1
    %s815 = scalar_lea.sflag [#allocation5], 1
    %816 = vsyncpa %s815, 1
    %817 = vsyncpa [#allocation7], 1
    %s818 = scalar_lea.sflag [#allocation7], 1
    %819 = vsyncpa %s818, 1

</llo_original>
